<compile_context>
chip_gen: v6e
topology: v6e:2x2x1
jax: 0.10.0
libtpu: 0.0.40
codegen_flags: <defaults>
</compile_context>

<pallas_src>
import functools

import jax
import jax.numpy as jnp
from jax import lax
from jax.experimental import pallas as pl
from jax.experimental.pallas import tpu as pltpu

MAX_DEPTH = 3   # AugMix samples depth from randint(1, 4) when depth == -1
NUM_OPS = 4     # elementwise op set implemented in-kernel (see kernel body)

# Only the elementwise members of composer's augmentation sets are implemented
# in-kernel; the dict exists to mirror the module's constructor validation.
augmentation_sets = {
    "all": ["solarize", "posterize", "brightness", "contrast"],
    "safe": ["solarize", "posterize", "brightness", "contrast"],
    "original": ["solarize", "posterize", "brightness", "contrast"],
}


def _device_kind() -> str:
    try:
        return jax.devices()[0].device_kind.lower()
    except Exception:
        return ""


def _compute_dtype():
    """bf16 chain math on v6e/v7x (packed VPU); f32 on v5e and older (no bf16 VPU)."""
    kind = _device_kind()
    if any(v in kind for v in ("v2", "v3", "v4", "v5")):
        return jnp.float32
    return jnp.bfloat16


def _vmem_limit_bytes() -> int:
    """v7x has 64 MiB physical VMEM per TensorCore; v5e/v6e have 128 MiB."""
    kind = _device_kind()
    if "v7" in kind or "7x" in kind:
        return 48 * 1024 * 1024
    return 64 * 1024 * 1024


def _pick_batch_tile(n: int, bytes_per_image: int,
                     target_bytes: int = 2 * 1024 * 1024) -> int:
    """Images per grid step: ~2 MiB of uint8 per input block (amortizes the
    ~0.35 us per-step overhead for small images), capped at n//2 so the grid
    keeps >= 2 steps for v7x's 2 TensorCores. Divisor-free: batch is padded."""
    if n <= 1:
        return 1
    tile = max(1, target_bytes // max(1, bytes_per_image))
    tile = min(tile, max(1, n // 2))
    return int(tile)


def _augmix_kernel(chain_w_ref, mix_w_ref, depth_ref, opid_ref, img_ref, out_ref,
                   *, severity, width, max_depth, batch_tile, n_images, compute_dtype):
    """One grid step == `batch_tile` images, lane-dense (R, 128) uint8 layout.

    chain_w_ref : SMEM (Np*width,)            float32 Dirichlet chain weights
    mix_w_ref   : SMEM (Np,)                  float32 Beta mixing weight
    depth_ref   : SMEM (Np*width,)            int32 chain depths (1..max_depth)
    opid_ref    : SMEM (Np*width*max_depth,)  int32 op id per (image, chain, step)
    img_ref     : VMEM (batch_tile, R, 128)   uint8 original images
    out_ref     : VMEM (batch_tile, R, 128)   uint8 mixed images
    """
    cdt = compute_dtype
    g = pl.program_id(0)
    base = g * batch_tile
    # Only process real images in the (possibly padded) tail block.
    valid = jnp.minimum(batch_tile, n_images - base)

    rows = img_ref.shape[1]
    inv_count = jnp.float32(1.0 / (rows * img_ref.shape[2]))

    # Severity -> op strength (deterministic mapping of composer's level sampling).
    # TODO(synk): composer samples the augmentation level uniformly up to `severity`
    # per call; here the mapping is deterministic, so the output distribution differs.
    sol_thresh = jnp.asarray(256.0 - 25.6 * severity, cdt)           # solarize threshold
    post_q = jnp.asarray(float(2 ** (severity // 2 + 1)), cdt)       # posterize quantum
    inv_post_q = jnp.asarray(1.0 / float(2 ** (severity // 2 + 1)), cdt)  # exact (pow2)
    enh = jnp.asarray(1.0 + 0.05 * severity, cdt)                    # enhancer factor
    zero = jnp.asarray(0.0, cdt)
    c255 = jnp.asarray(255.0, cdt)
    use_mxu_mean = rows >= 64          # for big images, move the reduce off the VPU
    ones_row = jnp.ones((1, rows), cdt)

    def solarize(a):
        return jnp.where(a < sol_thresh, a, c255 - a)

    def posterize(a):
        return jnp.floor(a * inv_post_q) * post_q

    def brightness(a):
        # enh >= 1 and a >= 0, so the lower clamp is redundant.
        return jnp.minimum(a * enh, c255)

    def contrast(a):
        # TODO(synk): PIL ImageEnhance.Contrast uses the grayscale (L) mean of the
        # uint8 image; a full-image mean over all channels is used here instead.
        if use_mxu_mean:
            # Offload the big reduce to the otherwise-idle MXU.
            row = jnp.dot(ones_row, a, preferred_element_type=jnp.float32)  # (1, 128)
            m = (jnp.sum(row) * inv_count).astype(cdt)
        else:
            m = (jnp.sum(a, dtype=jnp.float32) * inv_count).astype(cdt)
        return jnp.clip(m + (a - m) * enh, zero, c255)

    def apply_op(op, a):
        # Only the selected augmentation is evaluated (nested 2-way conds).
        return lax.cond(
            op == 0, solarize,
            lambda x: lax.cond(
                op == 1, posterize,
                lambda y: lax.cond(op == 2, brightness, contrast, y),
                x),
            a)

    def per_image(bl, carry):
        b = base + bl                                                  # global image idx
        orig32 = img_ref[bl].astype(jnp.int32).astype(jnp.float32)     # (R, 128) f32
        orig_c = orig32.astype(cdt)
        acc = jnp.zeros_like(orig32)                                   # f32 accumulator

        for chain in range(width):                 # width is small & static
            idx = b * width + chain
            d = depth_ref[idx]

            def step_body(step, a, _idx=idx):
                op = opid_ref[_idx * max_depth + step]
                return apply_op(op, a)

            # Dynamic trip count: only the live steps of the chain are executed
            # (no dead-step identity copies).
            aug = lax.fori_loop(0, d, step_body, orig_c)
            # TODO(synk): geometric PIL augmentations (shear_x/y, translate_x/y,
            # rotate) and histogram ops (equalize/autocontrast/color/sharpness)
            # have no clean Pallas elementwise equivalent and are omitted.
            acc = acc + chain_w_ref[idx] * aug.astype(jnp.float32)

        m = mix_w_ref[b]
        mixed = orig32 + m * (acc - orig32)        # == (1-m)*orig + m*acc
        # matches PIL Image.fromarray(np.uint8(mixed)): clamp then truncate toward 0
        out_ref[bl] = jnp.clip(mixed, 0.0, 255.0).astype(jnp.int32).astype(jnp.uint8)
        return carry

    lax.fori_loop(0, valid, per_image, 0)


class AugmentAndMixTransform:
    """JAX/Pallas port of composer.algorithms.augmix.AugmentAndMixTransform."""

    def __init__(self, severity: int = 3, depth: int = -1, width: int = 3,
                 alpha: float = 1.0, augmentation_set: str = "all"):
        if severity < 0 or severity > 10:
            raise ValueError("AugMix severity value must satisfy 0 <= severity <= 10")
        if width < 1:
            raise ValueError("AugMix width must be >= 1")
        if augmentation_set not in augmentation_sets.keys():
            raise KeyError(f"AugMix augmentation_set is not one of {augmentation_sets.keys()}")
        self.severity = severity
        self.depth = depth
        self.width = width
        self.alpha = alpha
        self.augmentation_set = augmentation_sets[augmentation_set]

    def __call__(self, img_u8: jax.Array, key: jax.Array) -> jax.Array:
        # img_u8: uint8, NCHW
        N, C, H, W = img_u8.shape
        total = C * H * W
        if total % 128 != 0:
            # TODO(synk): images whose flattened size is not a multiple of 128 lanes
            # would need lane padding plus a masked mean for the contrast op.
            raise ValueError("C*H*W must be a multiple of 128 for the lane-dense layout")
        R = total // 128   # R a multiple of 32 gives the densest u8 tiles; any R works
        max_depth = self.depth if self.depth > 0 else MAX_DEPTH

        # Batch tiling: divisor-free via padding to a multiple of the tile.
        b_tile = _pick_batch_tile(N, total)
        n_blocks = pl.cdiv(N, b_tile)
        n_pad = n_blocks * b_tile

        k_dir, k_beta, k_depth, k_op = jax.random.split(key, 4)
        chain_w = jax.random.dirichlet(
            k_dir, jnp.full((self.width,), self.alpha, jnp.float32), shape=(n_pad,)
        ).astype(jnp.float32).reshape(-1)                                # (n_pad*width,)
        mix_w = jax.random.beta(
            k_beta, self.alpha, self.alpha, shape=(n_pad,)
        ).astype(jnp.float32)                                            # (n_pad,)
        if self.depth > 0:
            depths = jnp.full((n_pad * self.width,), self.depth, dtype=jnp.int32)
        else:
            depths = jax.random.randint(k_depth, (n_pad * self.width,), 1, MAX_DEPTH + 1,
                                        dtype=jnp.int32)
        opids = jax.random.randint(k_op, (n_pad * self.width * max_depth,), 0, NUM_OPS,
                                   dtype=jnp.int32)

        # uint8 straight into the kernel; lane-dense (N, R, 128) layout.
        img = img_u8.reshape(N, R, 128)
        if n_pad != N:
            img = jnp.pad(img, ((0, n_pad - N), (0, 0), (0, 0)))

        kernel = functools.partial(_augmix_kernel,
                                   severity=self.severity,
                                   width=self.width,
                                   max_depth=max_depth,
                                   batch_tile=b_tile,
                                   n_images=N,
                                   compute_dtype=_compute_dtype())

        out = pl.pallas_call(
            kernel,
            grid=(n_blocks,),
            in_specs=[
                pl.BlockSpec(memory_space=pltpu.MemorySpace.SMEM),    # chain_w (flat 1D)
                pl.BlockSpec(memory_space=pltpu.MemorySpace.SMEM),    # mix_w
                pl.BlockSpec(memory_space=pltpu.MemorySpace.SMEM),    # depths (flat 1D)
                pl.BlockSpec(memory_space=pltpu.MemorySpace.SMEM),    # opids (flat 1D)
                pl.BlockSpec((b_tile, R, 128), lambda i: (i, 0, 0)),  # uint8 images
            ],
            out_specs=pl.BlockSpec((b_tile, R, 128), lambda i: (i, 0, 0)),
            out_shape=jax.ShapeDtypeStruct((n_pad, R, 128), jnp.uint8),
            compiler_params=pltpu.CompilerParams(
                dimension_semantics=("parallel",),
                vmem_limit_bytes=_vmem_limit_bytes(),
            ),
        )(chain_w, mix_w, depths, opids, img)

        # Output is already uint8 and clamped — slice off batch padding, reshape.
        return out[:N].reshape(N, C, H, W)


if __name__ == "__main__":
    key = jax.random.PRNGKey(0)
    k_img, k_rand = jax.random.split(key)

    # small deterministic "image batch": uint8 NCHW
    x = jax.random.randint(k_img, (2, 4, 16, 16), 0, 256, dtype=jnp.int32).astype(jnp.uint8)

    tfm = AugmentAndMixTransform(severity=3, depth=-1, width=3, alpha=1.0,
                                 augmentation_set="all")
    y = tfm(x, k_rand)
    jax.block_until_ready(y)

    assert y.shape == x.shape, (y.shape, x.shape)
    assert y.dtype == jnp.uint8, y.dtype
    print("KERNEL_OK")
</pallas_src>

<mosaic_0001>
module attributes {stable_mosaic.version = 11 : i64} {
  func.func @_augmix_kernel(%arg0: i32, %arg1: memref<6xf32, #tpu.memory_space<smem>>, %arg2: memref<2xf32, #tpu.memory_space<smem>>, %arg3: memref<6xi32, #tpu.memory_space<smem>>, %arg4: memref<18xi32, #tpu.memory_space<smem>>, %arg5: memref<1x8x128xi8, #tpu.memory_space<vmem>>, %arg6: memref<1x8x128xi8, #tpu.memory_space<vmem>>) attributes {dimension_semantics = [#tpu.dimension_semantics<parallel>], iteration_bounds = array<i64: 2>, scalar_prefetch = 0 : i64, scratch_operands = 0 : i64, tpu.core_type = #tpu.core_type<tc>, window_params = [{transform_indices = @transform_0, window_bounds = array<i64: 6>}, {transform_indices = @transform_1, window_bounds = array<i64: 2>}, {transform_indices = @transform_2, window_bounds = array<i64: 6>}, {transform_indices = @transform_3, window_bounds = array<i64: 18>}, {transform_indices = @transform_4, window_bounds = array<i64: 1, 8, 128>}, {transform_indices = @transform_5, window_bounds = array<i64: 1, 8, 128>}]} {
    %c1_i32 = arith.constant 1 : i32
    %0 = arith.muli %arg0, %c1_i32 : i32
    %c2_i32 = arith.constant 2 : i32
    %1 = arith.subi %c2_i32, %0 : i32
    %c1_i32_0 = arith.constant 1 : i32
    %2 = arith.minsi %c1_i32_0, %1 : i32
    %c0_i32 = arith.constant 0 : i32
    %cst = arith.constant 1.790000e+02 : bf16
    %cst_1 = arith.constant 2.550000e+02 : bf16
    %cst_2 = arith.constant 2.500000e-01 : bf16
    %cst_3 = arith.constant 4.000000e+00 : bf16
    %cst_4 = arith.constant 1.148440e+00 : bf16
    %cst_5 = arith.constant 9.765625E-4 : f32
    %cst_6 = arith.constant 0.000000e+00 : bf16
    %c0_i32_7 = arith.constant 0 : i32
    %3 = arith.subi %2, %c0_i32_7 : i32
    %4 = arith.addi %c0_i32_7, %3 : i32
    %c1_i32_8 = arith.constant 1 : i32
    scf.for %arg7 = %c0_i32_7 to %4 step %c1_i32_8  : i32 {
      %5 = arith.addi %0, %arg7 : i32
      %6 = arith.index_cast %arg7 : i32 to index
      %c0 = arith.constant 0 : index
      %c0_9 = arith.constant 0 : index
      %7 = vector.load %arg5[%6, %c0, %c0_9] : memref<1x8x128xi8, #tpu.memory_space<vmem>>, vector<1x8x128xi8>
      %8 = vector.shape_cast %7 : vector<1x8x128xi8> to vector<8x128xi8>
      %9 = arith.extui %8 : vector<8x128xi8> to vector<8x128xi32>
      %10 = arith.sitofp %9 : vector<8x128xi32> to vector<8x128xf32>
      %11 = arith.truncf %10 : vector<8x128xf32> to vector<8x128xbf16>
      %cst_10 = arith.constant 0.000000e+00 : f32
      %12 = vector.broadcast %cst_10 : f32 to vector<8x128xf32>
      %c3_i32 = arith.constant 3 : i32
      %13 = arith.muli %5, %c3_i32 : i32
      %c0_i32_11 = arith.constant 0 : i32
      %14 = arith.addi %13, %c0_i32_11 : i32
      %15 = arith.index_cast %14 : i32 to index
      %16 = memref.load %arg3[%15] : memref<6xi32, #tpu.memory_space<smem>>
      %c0_i32_12 = arith.constant 0 : i32
      %17 = arith.subi %16, %c0_i32_12 : i32
      %18 = arith.addi %c0_i32_12, %17 : i32
      %c1_i32_13 = arith.constant 1 : i32
      %19 = scf.for %arg8 = %c0_i32_12 to %18 step %c1_i32_13 iter_args(%arg9 = %11) -> (vector<8x128xbf16>)  : i32 {
        %c3_i32_26 = arith.constant 3 : i32
        %68 = arith.muli %14, %c3_i32_26 : i32
        %69 = arith.addi %68, %arg8 : i32
        %70 = arith.index_cast %69 : i32 to index
        %71 = memref.load %arg4[%70] : memref<18xi32, #tpu.memory_space<smem>>
        %c0_i32_27 = arith.constant 0 : i32
        %72 = arith.cmpi eq, %71, %c0_i32_27 : i32
        %73 = arith.extui %72 : i1 to i32
        %c0_i32_28 = arith.constant 0 : i32
        %74 = arith.cmpi ne, %73, %c0_i32_28 : i32
        %75 = scf.if %74 -> (vector<8x128xbf16>) {
          %76 = vector.broadcast %cst : bf16 to vector<8x128xbf16>
          %77 = arith.cmpf olt, %arg9, %76 : vector<8x128xbf16>
          %78 = vector.broadcast %cst_1 : bf16 to vector<8x128xbf16>
          %79 = arith.subf %78, %arg9 : vector<8x128xbf16>
          %80 = arith.select %77, %arg9, %79 : vector<8x128xi1>, vector<8x128xbf16>
          scf.yield %80 : vector<8x128xbf16>
        } else {
          %c1_i32_29 = arith.constant 1 : i32
          %76 = arith.cmpi eq, %71, %c1_i32_29 : i32
          %77 = arith.extui %76 : i1 to i32
          %c0_i32_30 = arith.constant 0 : i32
          %78 = arith.cmpi ne, %77, %c0_i32_30 : i32
          %79 = scf.if %78 -> (vector<8x128xbf16>) {
            %80 = vector.broadcast %cst_2 : bf16 to vector<8x128xbf16>
            %81 = arith.mulf %arg9, %80 : vector<8x128xbf16>
            %82 = math.floor %81 : vector<8x128xbf16>
            %83 = vector.broadcast %cst_3 : bf16 to vector<8x128xbf16>
            %84 = arith.mulf %82, %83 : vector<8x128xbf16>
            scf.yield %84 : vector<8x128xbf16>
          } else {
            %c2_i32_31 = arith.constant 2 : i32
            %80 = arith.cmpi eq, %71, %c2_i32_31 : i32
            %81 = arith.extui %80 : i1 to i32
            %c0_i32_32 = arith.constant 0 : i32
            %82 = arith.cmpi ne, %81, %c0_i32_32 : i32
            %83 = scf.if %82 -> (vector<8x128xbf16>) {
              %84 = vector.broadcast %cst_4 : bf16 to vector<8x128xbf16>
              %85 = arith.mulf %arg9, %84 : vector<8x128xbf16>
              %86 = vector.broadcast %cst_1 : bf16 to vector<8x128xbf16>
              %87 = arith.minimumf %85, %86 : vector<8x128xbf16>
              scf.yield %87 : vector<8x128xbf16>
            } else {
              %84 = arith.extf %arg9 : vector<8x128xbf16> to vector<8x128xf32>
              %85 = vector.shape_cast %84 : vector<8x128xf32> to vector<1x8x128xf32>
              %cst_33 = arith.constant dense<0.000000e+00> : vector<1xf32>
              %86 = vector.multi_reduction <add>, %85, %cst_33 [1, 2] : vector<1x8x128xf32> to vector<1xf32>
              %87 = vector.shape_cast %86 : vector<1xf32> to vector<1x1x1xf32>
              %88 = vector.extract %87[0, 0, 0] : f32 from vector<1x1x1xf32>
              %89 = arith.mulf %88, %cst_5 : f32
              %90 = arith.truncf %89 : f32 to bf16
              %91 = vector.broadcast %90 : bf16 to vector<8x128xbf16>
              %92 = arith.subf %arg9, %91 : vector<8x128xbf16>
              %93 = vector.broadcast %cst_4 : bf16 to vector<8x128xbf16>
              %94 = arith.mulf %92, %93 : vector<8x128xbf16>
              %95 = vector.broadcast %90 : bf16 to vector<8x128xbf16>
              %96 = arith.addf %95, %94 : vector<8x128xbf16>
              %97 = vector.broadcast %cst_6 : bf16 to vector<8x128xbf16>
              %98 = arith.maximumf %97, %96 : vector<8x128xbf16>
              %99 = vector.broadcast %cst_1 : bf16 to vector<8x128xbf16>
              %100 = arith.minimumf %99, %98 : vector<8x128xbf16>
              scf.yield %100 : vector<8x128xbf16>
            }
            scf.yield %83 : vector<8x128xbf16>
          }
          scf.yield %79 : vector<8x128xbf16>
        }
        scf.yield %75 : vector<8x128xbf16>
      }
      %20 = arith.index_cast %14 : i32 to index
      %21 = memref.load %arg1[%20] : memref<6xf32, #tpu.memory_space<smem>>
      %22 = arith.extf %19 : vector<8x128xbf16> to vector<8x128xf32>
      %23 = vector.broadcast %21 : f32 to vector<8x128xf32>
      %24 = arith.mulf %23, %22 : vector<8x128xf32>
      %25 = arith.addf %12, %24 : vector<8x128xf32>
      %c3_i32_14 = arith.constant 3 : i32
      %26 = arith.muli %5, %c3_i32_14 : i32
      %c1_i32_15 = arith.constant 1 : i32
      %27 = arith.addi %26, %c1_i32_15 : i32
      %28 = arith.index_cast %27 : i32 to index
      %29 = memref.load %arg3[%28] : memref<6xi32, #tpu.memory_space<smem>>
      %c0_i32_16 = arith.constant 0 : i32
      %30 = arith.subi %29, %c0_i32_16 : i32
      %31 = arith.addi %c0_i32_16, %30 : i32
      %c1_i32_17 = arith.constant 1 : i32
      %32 = scf.for %arg8 = %c0_i32_16 to %31 step %c1_i32_17 iter_args(%arg9 = %11) -> (vector<8x128xbf16>)  : i32 {
        %c3_i32_26 = arith.constant 3 : i32
        %68 = arith.muli %27, %c3_i32_26 : i32
        %69 = arith.addi %68, %arg8 : i32
        %70 = arith.index_cast %69 : i32 to index
        %71 = memref.load %arg4[%70] : memref<18xi32, #tpu.memory_space<smem>>
        %c0_i32_27 = arith.constant 0 : i32
        %72 = arith.cmpi eq, %71, %c0_i32_27 : i32
        %73 = arith.extui %72 : i1 to i32
        %c0_i32_28 = arith.constant 0 : i32
        %74 = arith.cmpi ne, %73, %c0_i32_28 : i32
        %75 = scf.if %74 -> (vector<8x128xbf16>) {
          %76 = vector.broadcast %cst : bf16 to vector<8x128xbf16>
          %77 = arith.cmpf olt, %arg9, %76 : vector<8x128xbf16>
          %78 = vector.broadcast %cst_1 : bf16 to vector<8x128xbf16>
          %79 = arith.subf %78, %arg9 : vector<8x128xbf16>
          %80 = arith.select %77, %arg9, %79 : vector<8x128xi1>, vector<8x128xbf16>
          scf.yield %80 : vector<8x128xbf16>
        } else {
          %c1_i32_29 = arith.constant 1 : i32
          %76 = arith.cmpi eq, %71, %c1_i32_29 : i32
          %77 = arith.extui %76 : i1 to i32
          %c0_i32_30 = arith.constant 0 : i32
          %78 = arith.cmpi ne, %77, %c0_i32_30 : i32
          %79 = scf.if %78 -> (vector<8x128xbf16>) {
            %80 = vector.broadcast %cst_2 : bf16 to vector<8x128xbf16>
            %81 = arith.mulf %arg9, %80 : vector<8x128xbf16>
            %82 = math.floor %81 : vector<8x128xbf16>
            %83 = vector.broadcast %cst_3 : bf16 to vector<8x128xbf16>
            %84 = arith.mulf %82, %83 : vector<8x128xbf16>
            scf.yield %84 : vector<8x128xbf16>
          } else {
            %c2_i32_31 = arith.constant 2 : i32
            %80 = arith.cmpi eq, %71, %c2_i32_31 : i32
            %81 = arith.extui %80 : i1 to i32
            %c0_i32_32 = arith.constant 0 : i32
            %82 = arith.cmpi ne, %81, %c0_i32_32 : i32
            %83 = scf.if %82 -> (vector<8x128xbf16>) {
              %84 = vector.broadcast %cst_4 : bf16 to vector<8x128xbf16>
              %85 = arith.mulf %arg9, %84 : vector<8x128xbf16>
              %86 = vector.broadcast %cst_1 : bf16 to vector<8x128xbf16>
              %87 = arith.minimumf %85, %86 : vector<8x128xbf16>
              scf.yield %87 : vector<8x128xbf16>
            } else {
              %84 = arith.extf %arg9 : vector<8x128xbf16> to vector<8x128xf32>
              %85 = vector.shape_cast %84 : vector<8x128xf32> to vector<1x8x128xf32>
              %cst_33 = arith.constant dense<0.000000e+00> : vector<1xf32>
              %86 = vector.multi_reduction <add>, %85, %cst_33 [1, 2] : vector<1x8x128xf32> to vector<1xf32>
              %87 = vector.shape_cast %86 : vector<1xf32> to vector<1x1x1xf32>
              %88 = vector.extract %87[0, 0, 0] : f32 from vector<1x1x1xf32>
              %89 = arith.mulf %88, %cst_5 : f32
              %90 = arith.truncf %89 : f32 to bf16
              %91 = vector.broadcast %90 : bf16 to vector<8x128xbf16>
              %92 = arith.subf %arg9, %91 : vector<8x128xbf16>
              %93 = vector.broadcast %cst_4 : bf16 to vector<8x128xbf16>
              %94 = arith.mulf %92, %93 : vector<8x128xbf16>
              %95 = vector.broadcast %90 : bf16 to vector<8x128xbf16>
              %96 = arith.addf %95, %94 : vector<8x128xbf16>
              %97 = vector.broadcast %cst_6 : bf16 to vector<8x128xbf16>
              %98 = arith.maximumf %97, %96 : vector<8x128xbf16>
              %99 = vector.broadcast %cst_1 : bf16 to vector<8x128xbf16>
              %100 = arith.minimumf %99, %98 : vector<8x128xbf16>
              scf.yield %100 : vector<8x128xbf16>
            }
            scf.yield %83 : vector<8x128xbf16>
          }
          scf.yield %79 : vector<8x128xbf16>
        }
        scf.yield %75 : vector<8x128xbf16>
      }
      %33 = arith.index_cast %27 : i32 to index
      %34 = memref.load %arg1[%33] : memref<6xf32, #tpu.memory_space<smem>>
      %35 = arith.extf %32 : vector<8x128xbf16> to vector<8x128xf32>
      %36 = vector.broadcast %34 : f32 to vector<8x128xf32>
      %37 = arith.mulf %36, %35 : vector<8x128xf32>
      %38 = arith.addf %25, %37 : vector<8x128xf32>
      %c3_i32_18 = arith.constant 3 : i32
      %39 = arith.muli %5, %c3_i32_18 : i32
      %c2_i32_19 = arith.constant 2 : i32
      %40 = arith.addi %39, %c2_i32_19 : i32
      %41 = arith.index_cast %40 : i32 to index
      %42 = memref.load %arg3[%41] : memref<6xi32, #tpu.memory_space<smem>>
      %c0_i32_20 = arith.constant 0 : i32
      %43 = arith.subi %42, %c0_i32_20 : i32
      %44 = arith.addi %c0_i32_20, %43 : i32
      %c1_i32_21 = arith.constant 1 : i32
      %45 = scf.for %arg8 = %c0_i32_20 to %44 step %c1_i32_21 iter_args(%arg9 = %11) -> (vector<8x128xbf16>)  : i32 {
        %c3_i32_26 = arith.constant 3 : i32
        %68 = arith.muli %40, %c3_i32_26 : i32
        %69 = arith.addi %68, %arg8 : i32
        %70 = arith.index_cast %69 : i32 to index
        %71 = memref.load %arg4[%70] : memref<18xi32, #tpu.memory_space<smem>>
        %c0_i32_27 = arith.constant 0 : i32
        %72 = arith.cmpi eq, %71, %c0_i32_27 : i32
        %73 = arith.extui %72 : i1 to i32
        %c0_i32_28 = arith.constant 0 : i32
        %74 = arith.cmpi ne, %73, %c0_i32_28 : i32
        %75 = scf.if %74 -> (vector<8x128xbf16>) {
          %76 = vector.broadcast %cst : bf16 to vector<8x128xbf16>
          %77 = arith.cmpf olt, %arg9, %76 : vector<8x128xbf16>
          %78 = vector.broadcast %cst_1 : bf16 to vector<8x128xbf16>
          %79 = arith.subf %78, %arg9 : vector<8x128xbf16>
          %80 = arith.select %77, %arg9, %79 : vector<8x128xi1>, vector<8x128xbf16>
          scf.yield %80 : vector<8x128xbf16>
        } else {
          %c1_i32_29 = arith.constant 1 : i32
          %76 = arith.cmpi eq, %71, %c1_i32_29 : i32
          %77 = arith.extui %76 : i1 to i32
          %c0_i32_30 = arith.constant 0 : i32
          %78 = arith.cmpi ne, %77, %c0_i32_30 : i32
          %79 = scf.if %78 -> (vector<8x128xbf16>) {
            %80 = vector.broadcast %cst_2 : bf16 to vector<8x128xbf16>
            %81 = arith.mulf %arg9, %80 : vector<8x128xbf16>
            %82 = math.floor %81 : vector<8x128xbf16>
            %83 = vector.broadcast %cst_3 : bf16 to vector<8x128xbf16>
            %84 = arith.mulf %82, %83 : vector<8x128xbf16>
            scf.yield %84 : vector<8x128xbf16>
          } else {
            %c2_i32_31 = arith.constant 2 : i32
            %80 = arith.cmpi eq, %71, %c2_i32_31 : i32
            %81 = arith.extui %80 : i1 to i32
            %c0_i32_32 = arith.constant 0 : i32
            %82 = arith.cmpi ne, %81, %c0_i32_32 : i32
            %83 = scf.if %82 -> (vector<8x128xbf16>) {
              %84 = vector.broadcast %cst_4 : bf16 to vector<8x128xbf16>
              %85 = arith.mulf %arg9, %84 : vector<8x128xbf16>
              %86 = vector.broadcast %cst_1 : bf16 to vector<8x128xbf16>
              %87 = arith.minimumf %85, %86 : vector<8x128xbf16>
              scf.yield %87 : vector<8x128xbf16>
            } else {
              %84 = arith.extf %arg9 : vector<8x128xbf16> to vector<8x128xf32>
              %85 = vector.shape_cast %84 : vector<8x128xf32> to vector<1x8x128xf32>
              %cst_33 = arith.constant dense<0.000000e+00> : vector<1xf32>
              %86 = vector.multi_reduction <add>, %85, %cst_33 [1, 2] : vector<1x8x128xf32> to vector<1xf32>
              %87 = vector.shape_cast %86 : vector<1xf32> to vector<1x1x1xf32>
              %88 = vector.extract %87[0, 0, 0] : f32 from vector<1x1x1xf32>
              %89 = arith.mulf %88, %cst_5 : f32
              %90 = arith.truncf %89 : f32 to bf16
              %91 = vector.broadcast %90 : bf16 to vector<8x128xbf16>
              %92 = arith.subf %arg9, %91 : vector<8x128xbf16>
              %93 = vector.broadcast %cst_4 : bf16 to vector<8x128xbf16>
              %94 = arith.mulf %92, %93 : vector<8x128xbf16>
              %95 = vector.broadcast %90 : bf16 to vector<8x128xbf16>
              %96 = arith.addf %95, %94 : vector<8x128xbf16>
              %97 = vector.broadcast %cst_6 : bf16 to vector<8x128xbf16>
              %98 = arith.maximumf %97, %96 : vector<8x128xbf16>
              %99 = vector.broadcast %cst_1 : bf16 to vector<8x128xbf16>
              %100 = arith.minimumf %99, %98 : vector<8x128xbf16>
              scf.yield %100 : vector<8x128xbf16>
            }
            scf.yield %83 : vector<8x128xbf16>
          }
          scf.yield %79 : vector<8x128xbf16>
        }
        scf.yield %75 : vector<8x128xbf16>
      }
      %46 = arith.index_cast %40 : i32 to index
      %47 = memref.load %arg1[%46] : memref<6xf32, #tpu.memory_space<smem>>
      %48 = arith.extf %45 : vector<8x128xbf16> to vector<8x128xf32>
      %49 = vector.broadcast %47 : f32 to vector<8x128xf32>
      %50 = arith.mulf %49, %48 : vector<8x128xf32>
      %51 = arith.addf %38, %50 : vector<8x128xf32>
      %52 = arith.index_cast %5 : i32 to index
      %53 = memref.load %arg2[%52] : memref<2xf32, #tpu.memory_space<smem>>
      %54 = arith.subf %51, %10 : vector<8x128xf32>
      %55 = vector.broadcast %53 : f32 to vector<8x128xf32>
      %56 = arith.mulf %55, %54 : vector<8x128xf32>
      %57 = arith.addf %10, %56 : vector<8x128xf32>
      %cst_22 = arith.constant 0.000000e+00 : f32
      %cst_23 = arith.constant 2.550000e+02 : f32
      %58 = vector.broadcast %cst_22 : f32 to vector<8x128xf32>
      %59 = arith.maximumf %58, %57 : vector<8x128xf32>
      %60 = vector.broadcast %cst_23 : f32 to vector<8x128xf32>
      %61 = arith.minimumf %60, %59 : vector<8x128xf32>
      %62 = arith.fptosi %61 : vector<8x128xf32> to vector<8x128xi32>
      %63 = arith.trunci %62 : vector<8x128xi32> to vector<8x128xi8>
      %64 = arith.index_cast %arg7 : i32 to index
      %c0_24 = arith.constant 0 : index
      %c0_25 = arith.constant 0 : index
      %65 = vector.load %arg6[%64, %c0_24, %c0_25] : memref<1x8x128xi8, #tpu.memory_space<vmem>>, vector<1x8x128xi8>
      %66 = vector.shape_cast %65 : vector<1x8x128xi8> to vector<8x128xi8>
      %67 = vector.shape_cast %63 : vector<8x128xi8> to vector<1x8x128xi8>
      tpu.vector_store %arg6[%64, %c0_24, %c0_25], %67 {strides = array<i32>} : memref<1x8x128xi8, #tpu.memory_space<vmem>>, vector<1x8x128xi8>,
    }
    return
  }
  func.func @transform_0(%arg0: i32) -> i32 {
    %c0_i32 = arith.constant 0 : i32
    %c0_i32_0 = arith.constant 0 : i32
    return %c0_i32 : i32
  }
  func.func @transform_1(%arg0: i32) -> i32 {
    %c0_i32 = arith.constant 0 : i32
    %c0_i32_0 = arith.constant 0 : i32
    return %c0_i32 : i32
  }
  func.func @transform_2(%arg0: i32) -> i32 {
    %c0_i32 = arith.constant 0 : i32
    %c0_i32_0 = arith.constant 0 : i32
    return %c0_i32 : i32
  }
  func.func @transform_3(%arg0: i32) -> i32 {
    %c0_i32 = arith.constant 0 : i32
    %c0_i32_0 = arith.constant 0 : i32
    return %c0_i32 : i32
  }
  func.func @transform_4(%arg0: i32) -> (i32, i32, i32) {
    %c0_i32 = arith.constant 0 : i32
    %c0_i32_0 = arith.constant 0 : i32
    %c0_i32_1 = arith.constant 0 : i32
    return %arg0, %c0_i32, %c0_i32_0 : i32, i32, i32
  }
  func.func @transform_5(%arg0: i32) -> (i32, i32, i32) {
    %c0_i32 = arith.constant 0 : i32
    %c0_i32_0 = arith.constant 0 : i32
    %c0_i32_1 = arith.constant 0 : i32
    return %arg0, %c0_i32, %c0_i32_0 : i32, i32, i32
  }
}

</mosaic_0001>

<llo_original>
// kernel: tpu_custom_call.1
$region0: #{tpu_custom_call.1}
  #allocation0 [shape = 'u32[]', space=smem, size = 0x4, offset = 0x4, fixed_abs, tag = 'smem constant byte address 0x4 - core index']
  #allocation1 [shape = 'u32[144,128]{1,0:T(1,128)}', space=vmem, size = 0x12000, scoped, tag = 'internal scratch']
  %s0 = inlined_call_operand.hbm [shape: f32[6], index: 0, kind: input, shape index: {}]
  %s1 = inlined_call_operand.vmem [shape: f32[2], index: 1, kind: input, shape index: {}]
  %s2 = inlined_call_operand.vmem [shape: s32[6], index: 2, kind: input, shape index: {}]
  %s3 = inlined_call_operand.vmem [shape: s32[18], index: 3, kind: input, shape index: {}]
  %s4 = inlined_call_operand.vmem [shape: u8[2,8,128], index: 4, kind: input, shape index: {}]
  %s5 = inlined_call_operand.hbm [shape: u8[2,8,128], index: 5, kind: output, shape index: {}]
  %s6 = sld [smem:[#allocation0]]
  $region169: #{tpu_custom_call.1} parent=0
    _
  %s8 = ssub.s32 1, %s6
  %s9 = scalar_select 0, %s8, %s6
  $region1: #{tpu_custom_call.1} parent=0
    #allocation2 [shape = 'u8[512]{0}', space=smem, size = 0x200, scoped, tag = 'input window, operand 0, single buffered']
    #allocation3 [shape = 's32[2]{0}', space=sflag, size = 0x8, scoped, tag = 'scoped memory for tpu_custom_call.1']
    #allocation4 [shape = 's32[2]{0}', space=sflag, size = 0x8, scoped, tag = 'scoped memory for tpu_custom_call.1']
    #allocation5 [shape = 's32[2]{0}', space=sflag, size = 0x8, scoped, tag = 'scoped memory for tpu_custom_call.1']
    #allocation6 [shape = 'u8[512]{0}', space=smem, size = 0x200, scoped, tag = 'input window, operand 1, single buffered']
    #allocation7 [shape = 'u8[512]{0}', space=smem, size = 0x200, scoped, tag = 'input window, operand 2, single buffered']
    #allocation8 [shape = 's32[1]{0}', space=sflag, size = 0x4, scoped, tag = 'scoped memory for tpu_custom_call.1']
    #allocation9 [shape = 'u8[512]{0}', space=smem, size = 0x200, scoped, tag = 'input window, operand 3, single buffered']
    #allocation10 [shape = 'u8[2048]{0}', space=vmem, size = 0x800, scoped, tag = 'output window, operand 0']
    %10 = vsyncpa [#allocation4], 0
    %11 = vsyncpa [#allocation5], 0
    %12 = vsyncpa [#allocation8], 0
    %13 = vsyncpa [#allocation3], 0
    %s14 = scalar_lea.sflag [#allocation3], 1
    %15 = vsyncpa %s14, 0
    loop: start=0, step=1, limit=4
    $region2: #{tpu_custom_call.1} parent=1 // loop_pre_header
      _
    $region3: #{tpu_custom_call.1} parent=1 // loop_header
      %s17 = sphi 0, %s21
      %p18 = scmp.ge.s32.totalorder %s17, 4
      %s25 = sphi 0, %s25
      %s27 = sphi 0, %s25
      %s28 = sphi 0, %s27
      %s42 = sphi 0, %s28
      %s46 = sphi 0, %s46
      %s48 = sphi 0, %s46
      %s49 = sphi 0, %s48
      %s63 = sphi 0, %s49
      %s67 = sphi 0, %s67
      %s69 = sphi 0, %s67
      %s70 = sphi 0, %s69
      %s84 = sphi 0, %s70
      %s88 = sphi 0, %s88
      %s90 = sphi 0, %s88
      %s91 = sphi 0, %s90
      %s105 = sphi 0, %s91
      %s111 = sphi 0, %s113
      %s114 = sphi 0, %s111
      %s115 = sphi 0, %s114
      %s131 = sphi 0, %s115
      %s137 = sphi 0, %s139
      %s140 = sphi 0, %s137
      %s141 = sphi 0, %s140
      %s157 = sphi 0, %s141
    $region4: #{tpu_custom_call.1} parent=1 // loop_header_branch
      %20 = sbr.rel (%p18) target = $region8
    $region5: #{tpu_custom_call.1} parent=1 // loop_body
      %s22 = ssub.s32 %s17, 1
      %s23 = ssub.s32 %s17, 2
      %s24 = sadd.s32 %s17, 1
      %s26 = sadd.s32 %s25, 1
      %p29 = scmp.eq.s32.totalorder %s17, 1
      %p30 = scmp.ne.s32.totalorder %s25, %s27
      %p31 = scmp.eq.s32.totalorder %s17, 0
      %p32 = por %p30, %p31
      %p33 = scmp.ne.s32.totalorder %s25, %s27
      %p34 = scmp.eq.s32.totalorder %s22, 1
      %p35 = por %p33, %p34
      %p36 = scmp.ne.s32.totalorder %s27, %s28
      %p37 = scmp.eq.s32.totalorder %s22, 0
      %p38 = por %p36, %p37
      %p39 = scmp.ne.s32.totalorder %s27, %s28
      %p40 = scmp.eq.s32.totalorder %s23, 1
      %p41 = por %p39, %p40
      %p43 = scmp.ne.s32.totalorder %s28, %s42
      %p44 = scmp.eq.s32.totalorder %s23, 0
      %p45 = por %p43, %p44
      %s47 = sadd.s32 %s46, 1
      %p50 = scmp.eq.s32.totalorder %s17, 1
      %p51 = scmp.ne.s32.totalorder %s46, %s48
      %p52 = scmp.eq.s32.totalorder %s17, 0
      %p53 = por %p51, %p52
      %p54 = scmp.ne.s32.totalorder %s46, %s48
      %p55 = scmp.eq.s32.totalorder %s22, 1
      %p56 = por %p54, %p55
      %p57 = scmp.ne.s32.totalorder %s48, %s49
      %p58 = scmp.eq.s32.totalorder %s22, 0
      %p59 = por %p57, %p58
      %p60 = scmp.ne.s32.totalorder %s48, %s49
      %p61 = scmp.eq.s32.totalorder %s23, 1
      %p62 = por %p60, %p61
      %p64 = scmp.ne.s32.totalorder %s49, %s63
      %p65 = scmp.eq.s32.totalorder %s23, 0
      %p66 = por %p64, %p65
      %s68 = sadd.s32 %s67, 1
      %p71 = scmp.eq.s32.totalorder %s17, 1
      %p72 = scmp.ne.s32.totalorder %s67, %s69
      %p73 = scmp.eq.s32.totalorder %s17, 0
      %p74 = por %p72, %p73
      %p75 = scmp.ne.s32.totalorder %s67, %s69
      %p76 = scmp.eq.s32.totalorder %s22, 1
      %p77 = por %p75, %p76
      %p78 = scmp.ne.s32.totalorder %s69, %s70
      %p79 = scmp.eq.s32.totalorder %s22, 0
      %p80 = por %p78, %p79
      %p81 = scmp.ne.s32.totalorder %s69, %s70
      %p82 = scmp.eq.s32.totalorder %s23, 1
      %p83 = por %p81, %p82
      %p85 = scmp.ne.s32.totalorder %s70, %s84
      %p86 = scmp.eq.s32.totalorder %s23, 0
      %p87 = por %p85, %p86
      %s89 = sadd.s32 %s88, 1
      %p92 = scmp.eq.s32.totalorder %s17, 1
      %p93 = scmp.ne.s32.totalorder %s88, %s90
      %p94 = scmp.eq.s32.totalorder %s17, 0
      %p95 = por %p93, %p94
      %p96 = scmp.ne.s32.totalorder %s88, %s90
      %p97 = scmp.eq.s32.totalorder %s22, 1
      %p98 = por %p96, %p97
      %p99 = scmp.ne.s32.totalorder %s90, %s91
      %p100 = scmp.eq.s32.totalorder %s22, 0
      %p101 = por %p99, %p100
      %p102 = scmp.ne.s32.totalorder %s90, %s91
      %p103 = scmp.eq.s32.totalorder %s23, 1
      %p104 = por %p102, %p103
      %p106 = scmp.ne.s32.totalorder %s91, %s105
      %p107 = scmp.eq.s32.totalorder %s23, 0
      %p108 = por %p106, %p107
      %s109 = ssub.s32 %s17, %s24
      %p110 = scmp.eq.s32.totalorder %s109, 0
      %s112 = sadd.s32 %s111, 1
      %s113 = scalar_select %p110, %s111, %s112
      %p116 = pneg %p110
      %p117 = scmp.eq.s32.totalorder %s17, 1
      %p118 = por %p116, %p117
      %p119 = scmp.ne.s32.totalorder %s111, %s114
      %p120 = scmp.eq.s32.totalorder %s17, 0
      %p121 = por %p119, %p120
      %p122 = scmp.ne.s32.totalorder %s111, %s114
      %p123 = scmp.eq.s32.totalorder %s22, 1
      %p124 = por %p122, %p123
      %p125 = scmp.ne.s32.totalorder %s114, %s115
      %p126 = scmp.eq.s32.totalorder %s22, 0
      %p127 = por %p125, %p126
      %p128 = scmp.ne.s32.totalorder %s114, %s115
      %p129 = scmp.eq.s32.totalorder %s23, 1
      %p130 = por %p128, %p129
      %p132 = scmp.ne.s32.totalorder %s115, %s131
      %p133 = scmp.eq.s32.totalorder %s23, 0
      %p134 = por %p132, %p133
      %s135 = ssub.s32 %s17, %s24
      %p136 = scmp.eq.s32.totalorder %s135, 0
      %s138 = sadd.s32 %s137, 1
      %s139 = scalar_select %p136, %s137, %s138
      %p142 = pneg %p136
      %p143 = scmp.eq.s32.totalorder %s17, 1
      %p144 = por %p142, %p143
      %p145 = scmp.ne.s32.totalorder %s137, %s140
      %p146 = scmp.eq.s32.totalorder %s17, 0
      %p147 = por %p145, %p146
      %p148 = scmp.ne.s32.totalorder %s137, %s140
      %p149 = scmp.eq.s32.totalorder %s22, 1
      %p150 = por %p148, %p149
      %p151 = scmp.ne.s32.totalorder %s140, %s141
      %p152 = scmp.eq.s32.totalorder %s22, 0
      %p153 = por %p151, %p152
      %p154 = scmp.ne.s32.totalorder %s140, %s141
      %p155 = scmp.eq.s32.totalorder %s23, 1
      %p156 = por %p154, %p155
      %p158 = scmp.ne.s32.totalorder %s141, %s157
      %p159 = scmp.eq.s32.totalorder %s23, 0
      %p160 = por %p158, %p159
      %p161 = scmp.le.s32.totalorder 1, %s17
      %p162 = scmp.lt.s32.totalorder %s17, 3
      %p163 = pnand %p161, %p162
      %p164 = pneg %p163
      // Predicated region
      $region9: #{tpu_custom_call.1} parent=5 // pred_check
        _
      $region10: #{tpu_custom_call.1} parent=5 // pred_check_branch
        %166 = sbr.rel (%p163) target = $region12
      $region11: #{tpu_custom_call.1} parent=5 // pred_region
        %s167 = ssub.s32 %s17, 1
        // Predicated region
        $region13: #{tpu_custom_call.1} parent=11 // pred_check
          %p168 = pneg %p38
        $region14: #{tpu_custom_call.1} parent=11 // pred_check_branch
          %170 = sbr.rel (%p168) target = $region16
        $region15: #{tpu_custom_call.1} parent=11 // pred_region
          %s172 = ssub.s32 16, 16
          %173 = vsyncadd [#allocation4], %s172
          %176 = dma.hbm_to_smem %s0, 16, [#allocation2], [#allocation4]
        $region16: #{tpu_custom_call.1} parent=11 // pred_fallthru
          _
        // Predicated region
        $region17: #{tpu_custom_call.1} parent=11 // pred_check
          %p177 = pneg %p59
        $region18: #{tpu_custom_call.1} parent=11 // pred_check_branch
          %179 = sbr.rel (%p177) target = $region20
        $region19: #{tpu_custom_call.1} parent=11 // pred_region
          %s181 = ssub.s32 16, 16
          %182 = vsyncadd [#allocation5], %s181
          %s184 = sshll.u32 %s1, 4
          %s185 = int_to_ptr.vmem [resolvable:$true] %s184
          %187 = dma.vmem_to_smem %s185, 16, [#allocation6], [#allocation5]
        $region20: #{tpu_custom_call.1} parent=11 // pred_fallthru
          _
        // Predicated region
        $region21: #{tpu_custom_call.1} parent=11 // pred_check
          %p188 = pneg %p80
        $region22: #{tpu_custom_call.1} parent=11 // pred_check_branch
          %190 = sbr.rel (%p188) target = $region24
        $region23: #{tpu_custom_call.1} parent=11 // pred_region
          %s192 = ssub.s32 16, 16
          %193 = vsyncadd [#allocation8], %s192
          %s195 = sshll.u32 %s2, 4
          %s196 = int_to_ptr.vmem [resolvable:$true] %s195
          %198 = dma.vmem_to_smem %s196, 16, [#allocation7], [#allocation8]
        $region24: #{tpu_custom_call.1} parent=11 // pred_fallthru
          _
        // Predicated region
        $region25: #{tpu_custom_call.1} parent=11 // pred_check
          %p199 = pneg %p101
        $region26: #{tpu_custom_call.1} parent=11 // pred_check_branch
          %201 = sbr.rel (%p199) target = $region28
        $region27: #{tpu_custom_call.1} parent=11 // pred_region
          %s203 = ssub.s32 16, 16
          %204 = vsyncadd [#allocation8], %s203
          %s206 = sshll.u32 %s3, 4
          %s207 = int_to_ptr.vmem [resolvable:$true] %s206
          %209 = dma.vmem_to_smem %s207, 16, [#allocation9], [#allocation8]
        $region28: #{tpu_custom_call.1} parent=11 // pred_fallthru
          _
      $region12: #{tpu_custom_call.1} parent=5 // pred_fallthru
        _
      %p210 = scmp.lt.s32.totalorder %s17, 2
      // Predicated region
      $region29: #{tpu_custom_call.1} parent=5 // pred_check
        %p211 = pneg %p210
      $region30: #{tpu_custom_call.1} parent=5 // pred_check_branch
        %213 = sbr.rel (%p211) target = $region32
      $region31: #{tpu_custom_call.1} parent=5 // pred_region
        // Predicated region
        $region33: #{tpu_custom_call.1} parent=31 // pred_check
          %p214 = pneg %p121
        $region34: #{tpu_custom_call.1} parent=31 // pred_check_branch
          %216 = sbr.rel (%p214) target = $region36
        $region35: #{tpu_custom_call.1} parent=31 // pred_region
          %p217 = scmp.lt.s32.totalorder %s17, 1
          %s218 = scalar_select %p217, %s17, 1
          %s219 = smul.addr %s218, 2
          %s220 = scalar_lea.vmem %s4, %s219
        $region36: #{tpu_custom_call.1} parent=31 // pred_fallthru
          _
      $region32: #{tpu_custom_call.1} parent=5 // pred_fallthru
        _
      %p221 = scmp.le.s32.totalorder 1, %s17
      %p222 = scmp.lt.s32.totalorder %s17, 3
      %p223 = pnand %p221, %p222
      %p224 = pneg %p223
      // Predicated region
      $region37: #{tpu_custom_call.1} parent=5 // pred_check
        _
      $region38: #{tpu_custom_call.1} parent=5 // pred_check_branch
        %226 = sbr.rel (%p223) target = $region40
      $region39: #{tpu_custom_call.1} parent=5 // pred_region
        %s227 = ssub.s32 %s17, 1
        // Predicated region
        $region41: #{tpu_custom_call.1} parent=39 // pred_check
          %p228 = pneg %p38
        $region42: #{tpu_custom_call.1} parent=39 // pred_check_branch
          %230 = sbr.rel (%p228) target = $region44
        $region43: #{tpu_custom_call.1} parent=39 // pred_region
          %231 = dma.done [#allocation4], 16
        $region44: #{tpu_custom_call.1} parent=39 // pred_fallthru
          _
        // Predicated region
        $region45: #{tpu_custom_call.1} parent=39 // pred_check
          %p232 = pneg %p59
        $region46: #{tpu_custom_call.1} parent=39 // pred_check_branch
          %234 = sbr.rel (%p232) target = $region48
        $region47: #{tpu_custom_call.1} parent=39 // pred_region
          %235 = dma.done [#allocation5], 16
        $region48: #{tpu_custom_call.1} parent=39 // pred_fallthru
          _
        // Predicated region
        $region49: #{tpu_custom_call.1} parent=39 // pred_check
          %p236 = pneg %p80
        $region50: #{tpu_custom_call.1} parent=39 // pred_check_branch
          %238 = sbr.rel (%p236) target = $region52
        $region51: #{tpu_custom_call.1} parent=39 // pred_region
          %239 = dma.done [#allocation8], 16
        $region52: #{tpu_custom_call.1} parent=39 // pred_fallthru
          _
        // Predicated region
        $region53: #{tpu_custom_call.1} parent=39 // pred_check
          %p240 = pneg %p101
        $region54: #{tpu_custom_call.1} parent=39 // pred_check_branch
          %242 = sbr.rel (%p240) target = $region56
        $region55: #{tpu_custom_call.1} parent=39 // pred_region
          %243 = dma.done [#allocation8], 16
        $region56: #{tpu_custom_call.1} parent=39 // pred_fallthru
          _
        %244 = sfence
        %p245 = pneg %p38
        %p246 = pneg %p35
        %p247 = pneg %p59
        %p248 = pneg %p56
        %p249 = pneg %p80
        %p250 = pneg %p77
        %p251 = pneg %p101
        %p252 = pneg %p98
        %p253 = scmp.lt.s32.totalorder %s22, 1
        %s254 = scalar_select %p253, %s22, 1
        %s255 = smul.addr %s254, 2
        %s256 = scalar_lea.vmem %s4, %s255
        %p257 = pneg %p127
        %p258 = pneg %p124
        %p259 = pneg %p153
        %p260 = pneg %p150
        %s261 = sand.u32 %s140, 1
        %s262 = scalar_lea.sflag [#allocation3], %s261
        %s263 = sand.u32 %s140, 1
        %s264 = smul.addr %s263, 2
        %s265 = scalar_lea.vmem [#allocation10], %s264
        %p266 = scmp.lt.s32.totalorder %s22, 1
        %s267 = scalar_select %p266, %s22, 1
        %s268 = smul.addr %s267, 2
        %s269 = scalar_lea.vmem %s4, %s268
        %s276 = ssub.s32 2, %s22
        %p277 = scmp.lt.s32.totalorder %s276, 1
        %s278 = scalar_select %p277, %s276, 1
        // While loop
        $region57: #{tpu_custom_call.1} parent=39 // loop_pre_header
          _
        $region58: #{tpu_custom_call.1} parent=39 // loop_header
          %s280 = sphi 0, %s282
          %p281 = scmp.ge.s32.totalorder %s280, %s278
        $region59: #{tpu_custom_call.1} parent=39 // loop_header_branch
          %284 = sbr.rel (%p281) target = $region63
        $region60: #{tpu_custom_call.1} parent=39 // loop_body
          %s285 = sadd.s32 %s22, %s280
          %s286 = smul.addr %s280, 2
          %s287 = scalar_lea.vmem %s269, %s286
          %v288 = vld [vmem:[%s287] sm:$0x3]
          %v289 = vunpack.c.0.s8 %v288
          %v290 = vand.u32 %v289, 255
          %v291 = vcvt.s32.f32 %v290
          %v292 = vunpack.c.l.u8.bf16 %v288
          %s293 = smul.u32 %s285, 3
          %s294 = sld [smem:[#allocation7 + %s293]]
          // While loop
          $region64: #{tpu_custom_call.1} parent=60 // loop_pre_header
            _
          $region65: #{tpu_custom_call.1} parent=60 // loop_header
            %s296 = sphi 0, %s298
            %p297 = scmp.ge.s32.totalorder %s296, %s294
            %v301 = vphi %v292, %v369
          $region66: #{tpu_custom_call.1} parent=60 // loop_header_branch
            %300 = sbr.rel (%p297) target = $region70
          $region67: #{tpu_custom_call.1} parent=60 // loop_body
            %s302 = smul.u32 %s285, 9
            %s303 = sadd.s32 %s302, %s296
            %s304 = sld [smem:[#allocation9 + %s303]]
            %p305 = scmp.eq.s32.totalorder %s304, 0
            // Predicated region
            $region71: #{tpu_custom_call.1} parent=67 // pred_check
              %p306 = pneg %p305
            $region72: #{tpu_custom_call.1} parent=67 // pred_check_branch
              %308 = sbr.rel (%p306) target = $region74
            $region73: #{tpu_custom_call.1} parent=67 // pred_region
              %vm309 = vcmp.lt.bf16.partialorder %v301, 1127433011
              %v310 = vsub.bf16 1132413823, %v301
              %v311 = vsel %vm309, %v301, %v310
            $region74: #{tpu_custom_call.1} parent=67 // pred_fallthru
              %v312 = vphi 0, %v311
            %p313 = pneg %p305
            // Predicated region
            $region75: #{tpu_custom_call.1} parent=67 // pred_check
              _
            $region76: #{tpu_custom_call.1} parent=67 // pred_check_branch
              %315 = sbr.rel (%p305) target = $region78
            $region77: #{tpu_custom_call.1} parent=67 // pred_region
              %p316 = scmp.eq.s32.totalorder %s304, 1
              // Predicated region
              $region79: #{tpu_custom_call.1} parent=77 // pred_check
                %p317 = pneg %p316
              $region80: #{tpu_custom_call.1} parent=77 // pred_check_branch
                %319 = sbr.rel (%p317) target = $region82
              $region81: #{tpu_custom_call.1} parent=77 // pred_region
                %v320 = vmul.bf16 %v301, 1048592000
                %v321 = vfloor.bf16 %v320
                %v322 = vmul.bf16 %v321, 1082146944
              $region82: #{tpu_custom_call.1} parent=77 // pred_fallthru
                %v323 = vphi 0, %v322
              %p324 = pneg %p316
              // Predicated region
              $region83: #{tpu_custom_call.1} parent=77 // pred_check
                _
              $region84: #{tpu_custom_call.1} parent=77 // pred_check_branch
                %326 = sbr.rel (%p316) target = $region86
              $region85: #{tpu_custom_call.1} parent=77 // pred_region
                %p327 = scmp.eq.s32.totalorder %s304, 2
                // Predicated region
                $region87: #{tpu_custom_call.1} parent=85 // pred_check
                  %p328 = pneg %p327
                $region88: #{tpu_custom_call.1} parent=85 // pred_check_branch
                  %330 = sbr.rel (%p328) target = $region90
                $region89: #{tpu_custom_call.1} parent=85 // pred_region
                  %v331 = vmul.bf16 %v301, 1066614675
                  %v332 = vmin.bf16 %v331, 1132413823
                $region90: #{tpu_custom_call.1} parent=85 // pred_fallthru
                  %v333 = vphi 0, %v332
                %p334 = pneg %p327
                // Predicated region
                $region91: #{tpu_custom_call.1} parent=85 // pred_check
                  _
                $region92: #{tpu_custom_call.1} parent=85 // pred_check_branch
                  %336 = sbr.rel (%p327) target = $region94
                $region93: #{tpu_custom_call.1} parent=85 // pred_region
                  %v337 = vunpack.c.l.bf16 %v301
                  %338 = vadd.xlane.f32.xlu0 %v337
                  %v339 = vpop.xlane.xlu0 %338
                  %v340 = vrot.slane %v339, 4
                  %v341 = vadd.f32 %v339, %v340
                  %v342 = vrot.slane %v341, 2
                  %v343 = vadd.f32 %v341, %v342
                  %v344 = vrot.slane %v343, 1
                  %v345 = vadd.f32 %v343, %v344
                  %s346 = vtos %v345
                  %s347 = smul.f32 %s346, 0.0009765625
                  %p349 = scmp.ne.f32.partialorder %s347, %s347
                  %s350 = sshrl.u32 %s347, 16
                  %s351 = sand.u32 %s350, 1
                  %s352 = sadd.s32 32767, %s351
                  %s353 = sadd.s32 %s347, %s352
                  %s354 = sand.u32 %s353, 4294901760
                  %s355 = scalar_select %p349, 2143289344, %s354
                  %s357 = sshrl.u32 %s355, 16
                  %s358 = sshll.u32 %s357, 16
                  %s359 = sor.u32 %s357, %s358
                  %v360 = vstv %s359
                  %v362 = vsub.bf16 %v301, %v360
                  %v363 = vmul.bf16 %v362, 1066614675
                  %v364 = vadd.bf16 %v360, %v363
                  %v365 = vmax.bf16 %v364, 0
                  %v366 = vmin.bf16 %v365, 1132413823
                $region94: #{tpu_custom_call.1} parent=85 // pred_fallthru
                  %v367 = vphi %v333, %v366
              $region86: #{tpu_custom_call.1} parent=77 // pred_fallthru
                %v368 = vphi %v323, %v367
            $region78: #{tpu_custom_call.1} parent=67 // pred_fallthru
              %v369 = vphi %v312, %v368
          $region68: #{tpu_custom_call.1} parent=60 // loop_footer
            %s298 = sadd.s32 %s296, 1
          $region69: #{tpu_custom_call.1} parent=60 // loop_footer_branch
            %295 = sbr.rel target = $region65
          $region70: #{tpu_custom_call.1} parent=60 // loop_exit
            _
          %s370 = sld [smem:[#allocation2 + %s293]]
          %v371 = vunpack.c.l.bf16 %v301
          %v372 = vstv %s370
          %v373 = vmul.f32 %v372, %v371
          %v374 = vadd.f32 %v373, 0.0
          %s375 = sadd.s32 %s293, 1
          %s376 = sld [smem:[#allocation7 + %s375]]
          // While loop
          $region95: #{tpu_custom_call.1} parent=60 // loop_pre_header
            _
          $region96: #{tpu_custom_call.1} parent=60 // loop_header
            %s378 = sphi 0, %s380
            %p379 = scmp.ge.s32.totalorder %s378, %s376
            %v383 = vphi %v292, %v451
          $region97: #{tpu_custom_call.1} parent=60 // loop_header_branch
            %382 = sbr.rel (%p379) target = $region101
          $region98: #{tpu_custom_call.1} parent=60 // loop_body
            %s384 = smul.u32 %s375, 3
            %s385 = sadd.s32 %s384, %s378
            %s386 = sld [smem:[#allocation9 + %s385]]
            %p387 = scmp.eq.s32.totalorder %s386, 0
            // Predicated region
            $region102: #{tpu_custom_call.1} parent=98 // pred_check
              %p388 = pneg %p387
            $region103: #{tpu_custom_call.1} parent=98 // pred_check_branch
              %390 = sbr.rel (%p388) target = $region105
            $region104: #{tpu_custom_call.1} parent=98 // pred_region
              %vm391 = vcmp.lt.bf16.partialorder %v383, 1127433011
              %v392 = vsub.bf16 1132413823, %v383
              %v393 = vsel %vm391, %v383, %v392
            $region105: #{tpu_custom_call.1} parent=98 // pred_fallthru
              %v394 = vphi 0, %v393
            %p395 = pneg %p387
            // Predicated region
            $region106: #{tpu_custom_call.1} parent=98 // pred_check
              _
            $region107: #{tpu_custom_call.1} parent=98 // pred_check_branch
              %397 = sbr.rel (%p387) target = $region109
            $region108: #{tpu_custom_call.1} parent=98 // pred_region
              %p398 = scmp.eq.s32.totalorder %s386, 1
              // Predicated region
              $region110: #{tpu_custom_call.1} parent=108 // pred_check
                %p399 = pneg %p398
              $region111: #{tpu_custom_call.1} parent=108 // pred_check_branch
                %401 = sbr.rel (%p399) target = $region113
              $region112: #{tpu_custom_call.1} parent=108 // pred_region
                %v402 = vmul.bf16 %v383, 1048592000
                %v403 = vfloor.bf16 %v402
                %v404 = vmul.bf16 %v403, 1082146944
              $region113: #{tpu_custom_call.1} parent=108 // pred_fallthru
                %v405 = vphi 0, %v404
              %p406 = pneg %p398
              // Predicated region
              $region114: #{tpu_custom_call.1} parent=108 // pred_check
                _
              $region115: #{tpu_custom_call.1} parent=108 // pred_check_branch
                %408 = sbr.rel (%p398) target = $region117
              $region116: #{tpu_custom_call.1} parent=108 // pred_region
                %p409 = scmp.eq.s32.totalorder %s386, 2
                // Predicated region
                $region118: #{tpu_custom_call.1} parent=116 // pred_check
                  %p410 = pneg %p409
                $region119: #{tpu_custom_call.1} parent=116 // pred_check_branch
                  %412 = sbr.rel (%p410) target = $region121
                $region120: #{tpu_custom_call.1} parent=116 // pred_region
                  %v413 = vmul.bf16 %v383, 1066614675
                  %v414 = vmin.bf16 %v413, 1132413823
                $region121: #{tpu_custom_call.1} parent=116 // pred_fallthru
                  %v415 = vphi 0, %v414
                %p416 = pneg %p409
                // Predicated region
                $region122: #{tpu_custom_call.1} parent=116 // pred_check
                  _
                $region123: #{tpu_custom_call.1} parent=116 // pred_check_branch
                  %418 = sbr.rel (%p409) target = $region125
                $region124: #{tpu_custom_call.1} parent=116 // pred_region
                  %v419 = vunpack.c.l.bf16 %v383
                  %420 = vadd.xlane.f32.xlu0 %v419
                  %v421 = vpop.xlane.xlu0 %420
                  %v422 = vrot.slane %v421, 4
                  %v423 = vadd.f32 %v421, %v422
                  %v424 = vrot.slane %v423, 2
                  %v425 = vadd.f32 %v423, %v424
                  %v426 = vrot.slane %v425, 1
                  %v427 = vadd.f32 %v425, %v426
                  %s428 = vtos %v427
                  %s429 = smul.f32 %s428, 0.0009765625
                  %p431 = scmp.ne.f32.partialorder %s429, %s429
                  %s432 = sshrl.u32 %s429, 16
                  %s433 = sand.u32 %s432, 1
                  %s434 = sadd.s32 32767, %s433
                  %s435 = sadd.s32 %s429, %s434
                  %s436 = sand.u32 %s435, 4294901760
                  %s437 = scalar_select %p431, 2143289344, %s436
                  %s439 = sshrl.u32 %s437, 16
                  %s440 = sshll.u32 %s439, 16
                  %s441 = sor.u32 %s439, %s440
                  %v442 = vstv %s441
                  %v444 = vsub.bf16 %v383, %v442
                  %v445 = vmul.bf16 %v444, 1066614675
                  %v446 = vadd.bf16 %v442, %v445
                  %v447 = vmax.bf16 %v446, 0
                  %v448 = vmin.bf16 %v447, 1132413823
                $region125: #{tpu_custom_call.1} parent=116 // pred_fallthru
                  %v449 = vphi %v415, %v448
              $region117: #{tpu_custom_call.1} parent=108 // pred_fallthru
                %v450 = vphi %v405, %v449
            $region109: #{tpu_custom_call.1} parent=98 // pred_fallthru
              %v451 = vphi %v394, %v450
          $region99: #{tpu_custom_call.1} parent=60 // loop_footer
            %s380 = sadd.s32 %s378, 1
          $region100: #{tpu_custom_call.1} parent=60 // loop_footer_branch
            %377 = sbr.rel target = $region96
          $region101: #{tpu_custom_call.1} parent=60 // loop_exit
            _
          %s452 = sld [smem:[#allocation2 + %s375]]
          %v453 = vunpack.c.l.bf16 %v383
          %v454 = vstv %s452
          %v455 = vmul.f32 %v454, %v453
          %v456 = vadd.f32 %v374, %v455
          %s457 = sadd.s32 %s293, 2
          %s458 = sld [smem:[#allocation7 + %s457]]
          // While loop
          $region126: #{tpu_custom_call.1} parent=60 // loop_pre_header
            _
          $region127: #{tpu_custom_call.1} parent=60 // loop_header
            %s460 = sphi 0, %s462
            %p461 = scmp.ge.s32.totalorder %s460, %s458
            %v465 = vphi %v292, %v533
          $region128: #{tpu_custom_call.1} parent=60 // loop_header_branch
            %464 = sbr.rel (%p461) target = $region132
          $region129: #{tpu_custom_call.1} parent=60 // loop_body
            %s466 = smul.u32 %s457, 3
            %s467 = sadd.s32 %s466, %s460
            %s468 = sld [smem:[#allocation9 + %s467]]
            %p469 = scmp.eq.s32.totalorder %s468, 0
            // Predicated region
            $region133: #{tpu_custom_call.1} parent=129 // pred_check
              %p470 = pneg %p469
            $region134: #{tpu_custom_call.1} parent=129 // pred_check_branch
              %472 = sbr.rel (%p470) target = $region136
            $region135: #{tpu_custom_call.1} parent=129 // pred_region
              %vm473 = vcmp.lt.bf16.partialorder %v465, 1127433011
              %v474 = vsub.bf16 1132413823, %v465
              %v475 = vsel %vm473, %v465, %v474
            $region136: #{tpu_custom_call.1} parent=129 // pred_fallthru
              %v476 = vphi 0, %v475
            %p477 = pneg %p469
            // Predicated region
            $region137: #{tpu_custom_call.1} parent=129 // pred_check
              _
            $region138: #{tpu_custom_call.1} parent=129 // pred_check_branch
              %479 = sbr.rel (%p469) target = $region140
            $region139: #{tpu_custom_call.1} parent=129 // pred_region
              %p480 = scmp.eq.s32.totalorder %s468, 1
              // Predicated region
              $region141: #{tpu_custom_call.1} parent=139 // pred_check
                %p481 = pneg %p480
              $region142: #{tpu_custom_call.1} parent=139 // pred_check_branch
                %483 = sbr.rel (%p481) target = $region144
              $region143: #{tpu_custom_call.1} parent=139 // pred_region
                %v484 = vmul.bf16 %v465, 1048592000
                %v485 = vfloor.bf16 %v484
                %v486 = vmul.bf16 %v485, 1082146944
              $region144: #{tpu_custom_call.1} parent=139 // pred_fallthru
                %v487 = vphi 0, %v486
              %p488 = pneg %p480
              // Predicated region
              $region145: #{tpu_custom_call.1} parent=139 // pred_check
                _
              $region146: #{tpu_custom_call.1} parent=139 // pred_check_branch
                %490 = sbr.rel (%p480) target = $region148
              $region147: #{tpu_custom_call.1} parent=139 // pred_region
                %p491 = scmp.eq.s32.totalorder %s468, 2
                // Predicated region
                $region149: #{tpu_custom_call.1} parent=147 // pred_check
                  %p492 = pneg %p491
                $region150: #{tpu_custom_call.1} parent=147 // pred_check_branch
                  %494 = sbr.rel (%p492) target = $region152
                $region151: #{tpu_custom_call.1} parent=147 // pred_region
                  %v495 = vmul.bf16 %v465, 1066614675
                  %v496 = vmin.bf16 %v495, 1132413823
                $region152: #{tpu_custom_call.1} parent=147 // pred_fallthru
                  %v497 = vphi 0, %v496
                %p498 = pneg %p491
                // Predicated region
                $region153: #{tpu_custom_call.1} parent=147 // pred_check
                  _
                $region154: #{tpu_custom_call.1} parent=147 // pred_check_branch
                  %500 = sbr.rel (%p491) target = $region156
                $region155: #{tpu_custom_call.1} parent=147 // pred_region
                  %v501 = vunpack.c.l.bf16 %v465
                  %502 = vadd.xlane.f32.xlu0 %v501
                  %v503 = vpop.xlane.xlu0 %502
                  %v504 = vrot.slane %v503, 4
                  %v505 = vadd.f32 %v503, %v504
                  %v506 = vrot.slane %v505, 2
                  %v507 = vadd.f32 %v505, %v506
                  %v508 = vrot.slane %v507, 1
                  %v509 = vadd.f32 %v507, %v508
                  %s510 = vtos %v509
                  %s511 = smul.f32 %s510, 0.0009765625
                  %p513 = scmp.ne.f32.partialorder %s511, %s511
                  %s514 = sshrl.u32 %s511, 16
                  %s515 = sand.u32 %s514, 1
                  %s516 = sadd.s32 32767, %s515
                  %s517 = sadd.s32 %s511, %s516
                  %s518 = sand.u32 %s517, 4294901760
                  %s519 = scalar_select %p513, 2143289344, %s518
                  %s521 = sshrl.u32 %s519, 16
                  %s522 = sshll.u32 %s521, 16
                  %s523 = sor.u32 %s521, %s522
                  %v524 = vstv %s523
                  %v526 = vsub.bf16 %v465, %v524
                  %v527 = vmul.bf16 %v526, 1066614675
                  %v528 = vadd.bf16 %v524, %v527
                  %v529 = vmax.bf16 %v528, 0
                  %v530 = vmin.bf16 %v529, 1132413823
                $region156: #{tpu_custom_call.1} parent=147 // pred_fallthru
                  %v531 = vphi %v497, %v530
              $region148: #{tpu_custom_call.1} parent=139 // pred_fallthru
                %v532 = vphi %v487, %v531
            $region140: #{tpu_custom_call.1} parent=129 // pred_fallthru
              %v533 = vphi %v476, %v532
          $region130: #{tpu_custom_call.1} parent=60 // loop_footer
            %s462 = sadd.s32 %s460, 1
          $region131: #{tpu_custom_call.1} parent=60 // loop_footer_branch
            %459 = sbr.rel target = $region127
          $region132: #{tpu_custom_call.1} parent=60 // loop_exit
            _
          %s534 = sld [smem:[#allocation2 + %s457]]
          %v535 = vunpack.c.l.bf16 %v465
          %v536 = vstv %s534
          %v537 = vmul.f32 %v536, %v535
          %v538 = vadd.f32 %v456, %v537
          %s539 = sld [smem:[#allocation6 + %s285]]
          %v540 = vsub.f32 %v538, %v291
          %v541 = vstv %s539
          %v542 = vmul.f32 %v541, %v540
          %v543 = vadd.f32 %v291, %v542
          %v544 = vmax.f32 %v543, 0.0
          %v545 = vmin.f32 %v544, 255.0
          %v546 = vcvt.f32.s32.to.zero.pseudo %v545
          %v547 = vpack.c.b16 %v546, %v546
          %v548 = vpack.c.b8 %v547, %v547
          %s549 = smul.addr %s280, 2
          %s550 = scalar_lea.vmem %s265, %s549 [#allocation10]
          %551 = vst [vmem:[%s550] sm:$0x3] %v548
        $region61: #{tpu_custom_call.1} parent=39 // loop_footer
          %s282 = sadd.s32 %s280, 1
        $region62: #{tpu_custom_call.1} parent=39 // loop_footer_branch
          %279 = sbr.rel target = $region58
        $region63: #{tpu_custom_call.1} parent=39 // loop_exit
          _
        %s552 = sand.u32 %s140, 1
        %s553 = scalar_lea.sflag [#allocation3], %s552
        %s554 = sand.u32 %s140, 1
        %s555 = smul.addr %s554, 2
        %s556 = scalar_lea.vmem [#allocation10], %s555
        // Predicated region
        $region157: #{tpu_custom_call.1} parent=39 // pred_check
          %p557 = pneg %p150
        $region158: #{tpu_custom_call.1} parent=39 // pred_check_branch
          %559 = sbr.rel (%p557) target = $region160
        $region159: #{tpu_custom_call.1} parent=39 // pred_region
          %s561 = ssub.s32 32, 32
          %562 = vsyncadd %s553, %s561
          %s563 = smul.addr %s22, 32
          %s564 = scalar_lea.hbm %s5, %s563
          %s566 = sshll.u32 %s556, 4
          %s567 = int_to_ptr.vmem [resolvable:$true] %s566
          %569 = dma.vmem_to_hbm [thread:$0]  %s567, 32, %s564, %s553
        $region160: #{tpu_custom_call.1} parent=39 // pred_fallthru
          _
      $region40: #{tpu_custom_call.1} parent=5 // pred_fallthru
        _
      %p570 = scmp.le.s32.totalorder 2, %s17
      // Predicated region
      $region161: #{tpu_custom_call.1} parent=5 // pred_check
        %p571 = pneg %p570
      $region162: #{tpu_custom_call.1} parent=5 // pred_check_branch
        %573 = sbr.rel (%p571) target = $region164
      $region163: #{tpu_custom_call.1} parent=5 // pred_region
        %s574 = ssub.s32 %s17, 2
        // Predicated region
        $region165: #{tpu_custom_call.1} parent=163 // pred_check
          %p575 = pneg %p156
        $region166: #{tpu_custom_call.1} parent=163 // pred_check_branch
          %577 = sbr.rel (%p575) target = $region168
        $region167: #{tpu_custom_call.1} parent=163 // pred_region
          %s578 = sand.u32 %s141, 1
          %s579 = scalar_lea.sflag [#allocation3], %s578
          %s580 = sand.u32 %s141, 1
          %s581 = smul.addr %s580, 2
          %s582 = scalar_lea.vmem [#allocation10], %s581
          %583 = dma.done %s579, 32
        $region168: #{tpu_custom_call.1} parent=163 // pred_fallthru
          _
      $region164: #{tpu_custom_call.1} parent=5 // pred_fallthru
        _
    $region6: #{tpu_custom_call.1} parent=1 // loop_footer
      %s21 = sadd.s32 1, %s17
    $region7: #{tpu_custom_call.1} parent=1 // loop_footer_branch
      %16 = sbr.rel target = $region3
    $region8: #{tpu_custom_call.1} parent=1 // loop_exit
      _
    %584 = vsyncpa [#allocation3], 1
    %s585 = scalar_lea.sflag [#allocation3], 1
    %586 = vsyncpa %s585, 1
    %587 = vsyncpa [#allocation4], 1
    %s588 = scalar_lea.sflag [#allocation4], 1
    %589 = vsyncpa %s588, 1
    %590 = vsyncpa [#allocation5], 1
    %s591 = scalar_lea.sflag [#allocation5], 1
    %592 = vsyncpa %s591, 1
    %593 = vsyncpa [#allocation8], 1

</llo_original>
